<compile_context>
chip_gen: v7x
topology: tpu7x:2x2x1
jax: 0.10.0
libtpu: 0.0.40
codegen_flags: <defaults>
</compile_context>

<pallas_src>
import functools

import jax
import jax.numpy as jnp
from jax.experimental import pallas as pl
from jax.experimental.pallas import tpu as pltpu

EPS = 1e-9          # incr: zp -> zp + eps
GAMMA = 0.25        # rho:  w  -> w + gamma * relu(w)
_LANE = 128


def _round_up(x, m):
    return (x + m - 1) // m * m


def _convi_kernel(p_ref, w_ref, b_ref, out_ref, *, c_pad):
    """One M-tile of the ConvI forward.

    p_ref  : (tm, K_pad)        im2col patches (zero-padded K)
    w_ref  : (K_pad, 2*c_pad)   [W | W_rho], each half padded to c_pad lanes
    b_ref  : (1,    2*c_pad)    [b | b_rho], padded the same way
    out_ref: (tm, c_pad)        lane-dense output tile (padding dropped outside)
    """
    p = p_ref[...]
    # Single fused MXU matmul: columns [0:c_pad) -> z, [c_pad:2*c_pad) -> zp.
    zz = jnp.dot(p, w_ref[...], preferred_element_type=jnp.float32) + b_ref[...]
    z = zz[:, :c_pad]
    zp = zz[:, c_pad:] + EPS                      # incr
    div = z * pl.reciprocal(zp, approx=False)     # self.div (EUP, not VALU div)
    out_ref[...] = (zp * div).astype(out_ref.dtype)


def _im2col(x, kh, kw, pad):
    """x: (N, C, H, W) -> patches (N*Ho*Wo, C*kh*kw); stride 1."""
    n, c, h, w = x.shape
    xp = jnp.pad(x, ((0, 0), (0, 0), (pad, pad), (pad, pad)))
    ho, wo = h + 2 * pad - kh + 1, w + 2 * pad - kw + 1
    slabs = []
    for i in range(kh):
        for j in range(kw):
            slabs.append(xp[:, :, i:i + ho, j:j + wo])
    # (kh*kw, N, C, Ho, Wo) -> (N, Ho, Wo, C, kh*kw): K index = c*kh*kw + i*kw + j
    p = jnp.stack(slabs, axis=0).transpose(1, 3, 4, 2, 0)
    return p.reshape(n * ho * wo, c * kh * kw), (n, ho, wo)


@functools.partial(jax.jit, static_argnames=("kh", "kw", "pad", "tm"))
def convi_forward(x, weight, bias, kh, kw, pad, tm=256):
    """x: (N, C_in, H, W); weight: (C_out, C_in, kh, kw); bias: (C_out,)."""
    c_out = weight.shape[0]

    # rho (gamma rule) applied to weight AND bias, as newlayer() does.
    mweight = weight + GAMMA * jnp.maximum(weight, 0.0)
    mbias = bias + GAMMA * jnp.maximum(bias, 0.0)

    patches, (n, ho, wo) = _im2col(x, kh, kw, pad)            # (M, K)
    m, k = patches.shape

    k_pad = _round_up(k, _LANE)                               # lane-dense K
    c_pad = _round_up(c_out, _LANE)                           # lane-dense C_out
    m_pad = _round_up(m, tm)                                  # no divisibility assert

    # Fused, padded weights: [W | W_rho] -> (K_pad, 2*c_pad); same for bias.
    w_flat = jnp.pad(weight.reshape(c_out, k).T,
                     ((0, k_pad - k), (0, c_pad - c_out)))
    wm_flat = jnp.pad(mweight.reshape(c_out, k).T,
                      ((0, k_pad - k), (0, c_pad - c_out)))
    w_fused = jnp.concatenate([w_flat, wm_flat], axis=1)      # (K_pad, 2*c_pad)
    b_fused = jnp.concatenate([jnp.pad(bias, (0, c_pad - c_out)),
                               jnp.pad(mbias, (0, c_pad - c_out))]
                              ).reshape(1, 2 * c_pad)

    patches_p = jnp.pad(patches, ((0, m_pad - m), (0, k_pad - k)))

    out_flat = pl.pallas_call(
        functools.partial(_convi_kernel, c_pad=c_pad),
        out_shape=jax.ShapeDtypeStruct((m_pad, c_pad), x.dtype),
        grid_spec=pltpu.PrefetchScalarGridSpec(
            num_scalar_prefetch=0,
            grid=(m_pad // tm,),
            in_specs=[
                pl.BlockSpec((tm, k_pad), lambda i: (i, 0)),        # patches tile
                pl.BlockSpec((k_pad, 2 * c_pad), lambda i: (0, 0)),  # fused W (resident)
                pl.BlockSpec((1, 2 * c_pad), lambda i: (0, 0)),      # fused bias
            ],
            out_specs=pl.BlockSpec((tm, c_pad), lambda i: (i, 0)),
        ),
        compiler_params=pltpu.CompilerParams(
            dimension_semantics=("parallel",)),
    )(patches_p, w_fused, b_fused)

    # drop padding, (M, C_out) -> (N, Ho, Wo, C_out) -> NCHW
    return out_flat[:m, :c_out].reshape(n, ho, wo, c_out).transpose(0, 3, 1, 2)


def _reference(x, weight, bias, pad):
    """Pure-JAX reference replicating the PyTorch forward exactly."""
    dn = jax.lax.conv_dimension_numbers(x.shape, weight.shape,
                                        ("NCHW", "OIHW", "NCHW"))
    conv = lambda w, b: jax.lax.conv_general_dilated(
        x, w, window_strides=(1, 1), padding=[(pad, pad), (pad, pad)],
        dimension_numbers=dn) + b.reshape(1, -1, 1, 1)
    mweight = weight + GAMMA * jnp.maximum(weight, 0.0)
    mbias = bias + GAMMA * jnp.maximum(bias, 0.0)
    z = conv(weight, bias)
    zp = conv(mweight, mbias) + EPS
    return zp * (z / zp)


if __name__ == "__main__":
    key = jax.random.PRNGKey(0)
    kx, kw_, kb = jax.random.split(key, 3)

    N, C_IN, H, W = 2, 4, 16, 16
    C_OUT, KH, KW, PAD = 8, 3, 3, 1

    x = jax.random.normal(kx, (N, C_IN, H, W), dtype=jnp.float32)
    weight = jax.random.normal(kw_, (C_OUT, C_IN, KH, KW), dtype=jnp.float32) * 0.1
    bias = jax.random.normal(kb, (C_OUT,), dtype=jnp.float32) * 0.1

    out = convi_forward(x, weight, bias, KH, KW, PAD)
    out = jax.block_until_ready(out)

    ref = _reference(x, weight, bias, PAD)
    assert out.shape == (N, C_OUT, H, W)
    assert bool(jnp.allclose(out, ref, atol=1e-4, rtol=1e-4))

    print("KERNEL_OK")
</pallas_src>

<mosaic_0001>
module attributes {stable_mosaic.version = 11 : i64} {
  func.func @_convi_kernel(%arg0: i32, %arg1: memref<256x128xf32, #tpu.memory_space<vmem>>, %arg2: memref<128x256xf32, #tpu.memory_space<vmem>>, %arg3: memref<1x256xf32, #tpu.memory_space<vmem>>, %arg4: memref<256x128xf32, #tpu.memory_space<vmem>>) attributes {dimension_semantics = [#tpu.dimension_semantics<parallel>], iteration_bounds = array<i64: 2>, scalar_prefetch = 0 : i64, scratch_operands = 0 : i64, tpu.core_type = #tpu.core_type<tc>, window_params = [{transform_indices = @transform_0, window_bounds = array<i64: 256, 128>}, {pipeline_mode = #tpu.pipeline_mode<synchronous>, transform_indices = @transform_1, window_bounds = array<i64: 128, 256>}, {pipeline_mode = #tpu.pipeline_mode<synchronous>, transform_indices = @transform_2, window_bounds = array<i64: 1, 256>}, {transform_indices = @transform_3, window_bounds = array<i64: 256, 128>}]} {
    %c0 = arith.constant 0 : index
    %c0_0 = arith.constant 0 : index
    %0 = vector.load %arg1[%c0, %c0_0] : memref<256x128xf32, #tpu.memory_space<vmem>>, vector<256x128xf32>
    %c0_1 = arith.constant 0 : index
    %c0_2 = arith.constant 0 : index
    %1 = vector.load %arg2[%c0_1, %c0_2] : memref<128x256xf32, #tpu.memory_space<vmem>>, vector<128x256xf32>
    %cst = arith.constant dense<0.000000e+00> : vector<256x256xf32>
    %2 = tpu.matmul %0, %1, %cst {dimension_numbers = #tpu.dot_dimension_numbers<[1], [0], [0], [1], [0, 0, 1, 1], [], []>} : vector<256x128xf32>, vector<128x256xf32>, vector<256x256xf32> -> vector<256x256xf32>
    %c0_3 = arith.constant 0 : index
    %c0_4 = arith.constant 0 : index
    %3 = vector.load %arg3[%c0_3, %c0_4] : memref<1x256xf32, #tpu.memory_space<vmem>>, vector<1x256xf32>
    %4 = vector.broadcast %3 : vector<1x256xf32> to vector<256x256xf32>
    %5 = arith.addf %2, %4 : vector<256x256xf32>
    %6 = vector.extract_strided_slice %5 {offsets = [0, 0], sizes = [256, 128], strides = [1, 1]} : vector<256x256xf32> to vector<256x128xf32>
    %7 = vector.extract_strided_slice %5 {offsets = [0, 128], sizes = [256, 128], strides = [1, 1]} : vector<256x256xf32> to vector<256x128xf32>
    %cst_5 = arith.constant 9.99999971E-10 : f32
    %8 = vector.broadcast %cst_5 : f32 to vector<256x128xf32>
    %9 = arith.addf %7, %8 : vector<256x128xf32>
    %10 = tpu.reciprocal %9 : vector<256x128xf32> -> vector<256x128xf32>
    %11 = arith.mulf %6, %10 : vector<256x128xf32>
    %12 = arith.mulf %9, %11 : vector<256x128xf32>
    %c0_6 = arith.constant 0 : index
    %c0_7 = arith.constant 0 : index
    %13 = vector.load %arg4[%c0_6, %c0_7] : memref<256x128xf32, #tpu.memory_space<vmem>>, vector<256x128xf32>
    tpu.vector_store %arg4[%c0_6, %c0_7], %12 {strides = array<i32>} : memref<256x128xf32, #tpu.memory_space<vmem>>, vector<256x128xf32>,
    return
  }
  func.func @transform_0(%arg0: i32) -> (i32, i32) {
    %c0_i32 = arith.constant 0 : i32
    %c0_i32_0 = arith.constant 0 : i32
    return %arg0, %c0_i32 : i32, i32
  }
  func.func @transform_1(%arg0: i32) -> (i32, i32) {
    %c0_i32 = arith.constant 0 : i32
    %c0_i32_0 = arith.constant 0 : i32
    %c0_i32_1 = arith.constant 0 : i32
    return %c0_i32, %c0_i32_0 : i32, i32
  }
  func.func @transform_2(%arg0: i32) -> (i32, i32) {
    %c0_i32 = arith.constant 0 : i32
    %c0_i32_0 = arith.constant 0 : i32
    %c0_i32_1 = arith.constant 0 : i32
    return %c0_i32, %c0_i32_0 : i32, i32
  }
  func.func @transform_3(%arg0: i32) -> (i32, i32) {
    %c0_i32 = arith.constant 0 : i32
    %c0_i32_0 = arith.constant 0 : i32
    return %arg0, %c0_i32 : i32, i32
  }
}

</mosaic_0001>

<llo_original>
// kernel: convi_forward.1
$region0: #{convi_forward.1}
  #allocation0 [shape = 'u32[]', space=smem, size = 0x4, offset = 0x4, fixed_abs, tag = 'smem constant byte address 0x4 - core index']
  #allocation1 [shape = 'u32[144,128]{1,0:T(1,128)}', space=vmem, size = 0x12000, scoped, tag = 'internal scratch']
  %s0 = inlined_call_operand.vmem [shape: f32[512,128], index: 0, kind: input, shape index: {}]
  %s1 = inlined_call_operand.vmem [shape: f32[128,256], index: 1, kind: input, shape index: {}]
  %s2 = inlined_call_operand.vmem [shape: f32[1,256], index: 2, kind: input, shape index: {}]
  %s3 = inlined_call_operand.vmem [shape: f32[512,128], index: 3, kind: output, shape index: {}]
  %s4 = sld [smem:[#allocation0]]
  $region45: #{convi_forward.1} parent=0
    _
  %s6 = ssub.s32 1, %s4
  %s7 = scalar_select 0, %s6, %s4
  loop: start=0, step=1, limit=4
  $region2: #{convi_forward.1} parent=0 // loop_pre_header
    _
  $region3: #{convi_forward.1} parent=0 // loop_header
    %s9 = sphi 0, %s13
    %p10 = scmp.ge.s32.totalorder %s9, 4
    %s19 = sphi 0, %s21
    %s22 = sphi 0, %s19
    %s23 = sphi 0, %s22
    %s39 = sphi 0, %s23
    %s43 = sphi 0, %s43
    %s45 = sphi 0, %s43
    %s46 = sphi 0, %s45
    %s60 = sphi 0, %s46
    %s64 = sphi 0, %s64
    %s66 = sphi 0, %s64
    %s67 = sphi 0, %s66
    %s81 = sphi 0, %s67
    %s87 = sphi 0, %s89
    %s90 = sphi 0, %s87
    %s91 = sphi 0, %s90
    %s107 = sphi 0, %s91
  $region4: #{convi_forward.1} parent=0 // loop_header_branch
    %12 = sbr.rel (%p10) target = $region8
  $region5: #{convi_forward.1} parent=0 // loop_body
    %s14 = ssub.s32 %s9, 1
    %s15 = ssub.s32 %s9, 2
    %s16 = sadd.s32 %s9, 1
    %s17 = ssub.s32 %s9, %s16
    %p18 = scmp.eq.s32.totalorder %s17, 0
    %s20 = sadd.s32 %s19, 1
    %s21 = scalar_select %p18, %s19, %s20
    %p24 = pneg %p18
    %p25 = scmp.eq.s32.totalorder %s9, 1
    %p26 = por %p24, %p25
    %p27 = scmp.ne.s32.totalorder %s19, %s22
    %p28 = scmp.eq.s32.totalorder %s9, 0
    %p29 = por %p27, %p28
    %p30 = scmp.ne.s32.totalorder %s19, %s22
    %p31 = scmp.eq.s32.totalorder %s14, 1
    %p32 = por %p30, %p31
    %p33 = scmp.ne.s32.totalorder %s22, %s23
    %p34 = scmp.eq.s32.totalorder %s14, 0
    %p35 = por %p33, %p34
    %p36 = scmp.ne.s32.totalorder %s22, %s23
    %p37 = scmp.eq.s32.totalorder %s15, 1
    %p38 = por %p36, %p37
    %p40 = scmp.ne.s32.totalorder %s23, %s39
    %p41 = scmp.eq.s32.totalorder %s15, 0
    %p42 = por %p40, %p41
    %s44 = sadd.s32 %s43, 1
    %p47 = scmp.eq.s32.totalorder %s9, 1
    %p48 = scmp.ne.s32.totalorder %s43, %s45
    %p49 = scmp.eq.s32.totalorder %s9, 0
    %p50 = por %p48, %p49
    %p51 = scmp.ne.s32.totalorder %s43, %s45
    %p52 = scmp.eq.s32.totalorder %s14, 1
    %p53 = por %p51, %p52
    %p54 = scmp.ne.s32.totalorder %s45, %s46
    %p55 = scmp.eq.s32.totalorder %s14, 0
    %p56 = por %p54, %p55
    %p57 = scmp.ne.s32.totalorder %s45, %s46
    %p58 = scmp.eq.s32.totalorder %s15, 1
    %p59 = por %p57, %p58
    %p61 = scmp.ne.s32.totalorder %s46, %s60
    %p62 = scmp.eq.s32.totalorder %s15, 0
    %p63 = por %p61, %p62
    %s65 = sadd.s32 %s64, 1
    %p68 = scmp.eq.s32.totalorder %s9, 1
    %p69 = scmp.ne.s32.totalorder %s64, %s66
    %p70 = scmp.eq.s32.totalorder %s9, 0
    %p71 = por %p69, %p70
    %p72 = scmp.ne.s32.totalorder %s64, %s66
    %p73 = scmp.eq.s32.totalorder %s14, 1
    %p74 = por %p72, %p73
    %p75 = scmp.ne.s32.totalorder %s66, %s67
    %p76 = scmp.eq.s32.totalorder %s14, 0
    %p77 = por %p75, %p76
    %p78 = scmp.ne.s32.totalorder %s66, %s67
    %p79 = scmp.eq.s32.totalorder %s15, 1
    %p80 = por %p78, %p79
    %p82 = scmp.ne.s32.totalorder %s67, %s81
    %p83 = scmp.eq.s32.totalorder %s15, 0
    %p84 = por %p82, %p83
    %s85 = ssub.s32 %s9, %s16
    %p86 = scmp.eq.s32.totalorder %s85, 0
    %s88 = sadd.s32 %s87, 1
    %s89 = scalar_select %p86, %s87, %s88
    %p92 = pneg %p86
    %p93 = scmp.eq.s32.totalorder %s9, 1
    %p94 = por %p92, %p93
    %p95 = scmp.ne.s32.totalorder %s87, %s90
    %p96 = scmp.eq.s32.totalorder %s9, 0
    %p97 = por %p95, %p96
    %p98 = scmp.ne.s32.totalorder %s87, %s90
    %p99 = scmp.eq.s32.totalorder %s14, 1
    %p100 = por %p98, %p99
    %p101 = scmp.ne.s32.totalorder %s90, %s91
    %p102 = scmp.eq.s32.totalorder %s14, 0
    %p103 = por %p101, %p102
    %p104 = scmp.ne.s32.totalorder %s90, %s91
    %p105 = scmp.eq.s32.totalorder %s15, 1
    %p106 = por %p104, %p105
    %p108 = scmp.ne.s32.totalorder %s91, %s107
    %p109 = scmp.eq.s32.totalorder %s15, 0
    %p110 = por %p108, %p109
    %p111 = scmp.le.s32.totalorder 1, %s9
    %p112 = scmp.lt.s32.totalorder %s9, 3
    %p113 = pnand %p111, %p112
    %p114 = pneg %p113
    // Predicated region
    $region9: #{convi_forward.1} parent=5 // pred_check
      _
    $region10: #{convi_forward.1} parent=5 // pred_check_branch
      %116 = sbr.rel (%p113) target = $region12
    $region11: #{convi_forward.1} parent=5 // pred_region
      %s117 = ssub.s32 %s9, 1
      // Predicated region
      $region13: #{convi_forward.1} parent=11 // pred_check
        %p118 = pneg %p56
      $region14: #{convi_forward.1} parent=11 // pred_check_branch
        %120 = sbr.rel (%p118) target = $region16
      $region15: #{convi_forward.1} parent=11 // pred_region
        _
      $region16: #{convi_forward.1} parent=11 // pred_fallthru
        _
      // Predicated region
      $region17: #{convi_forward.1} parent=11 // pred_check
        %p121 = pneg %p77
      $region18: #{convi_forward.1} parent=11 // pred_check_branch
        %123 = sbr.rel (%p121) target = $region20
      $region19: #{convi_forward.1} parent=11 // pred_region
        _
      $region20: #{convi_forward.1} parent=11 // pred_fallthru
        _
    $region12: #{convi_forward.1} parent=5 // pred_fallthru
      _
    %p124 = scmp.lt.s32.totalorder %s9, 2
    // Predicated region
    $region21: #{convi_forward.1} parent=5 // pred_check
      %p125 = pneg %p124
    $region22: #{convi_forward.1} parent=5 // pred_check_branch
      %127 = sbr.rel (%p125) target = $region24
    $region23: #{convi_forward.1} parent=5 // pred_region
      // Predicated region
      $region25: #{convi_forward.1} parent=23 // pred_check
        %p128 = pneg %p29
      $region26: #{convi_forward.1} parent=23 // pred_check_branch
        %130 = sbr.rel (%p128) target = $region28
      $region27: #{convi_forward.1} parent=23 // pred_region
        %s131 = smul.u32 32, %s9
        %p132 = scmp.lt.s32.totalorder %s131, 63
        %s133 = scalar_select %p132, %s131, 63
        %s134 = smul.addr %s133, 8
        %s135 = scalar_lea.vmem %s0, %s134
        %s136 = smul.u32 32, %s9
      $region28: #{convi_forward.1} parent=23 // pred_fallthru
        _
    $region24: #{convi_forward.1} parent=5 // pred_fallthru
      _
    %p137 = scmp.le.s32.totalorder 1, %s9
    %p138 = scmp.lt.s32.totalorder %s9, 3
    %p139 = pnand %p137, %p138
    %p140 = pneg %p139
    // Predicated region
    $region29: #{convi_forward.1} parent=5 // pred_check
      _
    $region30: #{convi_forward.1} parent=5 // pred_check_branch
      %142 = sbr.rel (%p139) target = $region32
    $region31: #{convi_forward.1} parent=5 // pred_region
      %s143 = ssub.s32 %s9, 1
      %s144 = smul.u32 32, %s14
      %p145 = scmp.lt.s32.totalorder %s144, 63
      %s146 = scalar_select %p145, %s144, 63
      %s147 = smul.addr %s146, 8
      %s148 = scalar_lea.vmem %s0, %s147
      %p149 = pneg %p35
      %p150 = pneg %p32
      %p151 = pneg %p56
      %p152 = pneg %p53
      %p153 = pneg %p77
      %p154 = pneg %p74
      %p155 = pneg %p103
      %p156 = pneg %p100
      %s157 = smul.u32 32, %s14
      %p158 = scmp.lt.s32.totalorder %s157, 63
      %s159 = scalar_select %p158, %s157, 63
      %s160 = smul.addr %s159, 8
      %s161 = scalar_lea.vmem %s3, %s160
      %s162 = smul.u32 32, %s14
      %p163 = scmp.lt.s32.totalorder %s162, 63
      %s164 = scalar_select %p163, %s162, 63
      %s165 = smul.addr %s164, 8
      %s166 = scalar_lea.vmem %s0, %s165
      %s167 = smul.u32 32, %s14
      %s168 = smul.u32 32, %s14
      %p169 = scmp.lt.s32.totalorder %s168, 63
      %s170 = scalar_select %p169, %s168, 63
      %s171 = smul.addr %s170, 8
      %s172 = scalar_lea.vmem %s3, %s171
      %s173 = smul.u32 32, %s14
      %v174 = vld [vmem:[%s166] sm:$0xff]
      %v175 = vld [vmem:[%s166 + $0x8] sm:$0xff]
      %v176 = vld [vmem:[%s166 + $0x10] sm:$0xff]
      %v177 = vld [vmem:[%s166 + $0x18] sm:$0xff]
      %v178 = vld [vmem:[%s166 + $0x20] sm:$0xff]
      %v179 = vld [vmem:[%s166 + $0x28] sm:$0xff]
      %v180 = vld [vmem:[%s166 + $0x30] sm:$0xff]
      %v181 = vld [vmem:[%s166 + $0x38] sm:$0xff]
      %v182 = vld [vmem:[%s166 + $0x40] sm:$0xff]
      %v183 = vld [vmem:[%s166 + $0x48] sm:$0xff]
      %v184 = vld [vmem:[%s166 + $0x50] sm:$0xff]
      %v185 = vld [vmem:[%s166 + $0x58] sm:$0xff]
      %v186 = vld [vmem:[%s166 + $0x60] sm:$0xff]
      %v187 = vld [vmem:[%s166 + $0x68] sm:$0xff]
      %v188 = vld [vmem:[%s166 + $0x70] sm:$0xff]
      %v189 = vld [vmem:[%s166 + $0x78] sm:$0xff]
      %v190 = vld [vmem:[%s166 + $0x80] sm:$0xff]
      %v191 = vld [vmem:[%s166 + $0x88] sm:$0xff]
      %v192 = vld [vmem:[%s166 + $0x90] sm:$0xff]
      %v193 = vld [vmem:[%s166 + $0x98] sm:$0xff]
      %v194 = vld [vmem:[%s166 + $0xa0] sm:$0xff]
      %v195 = vld [vmem:[%s166 + $0xa8] sm:$0xff]
      %v196 = vld [vmem:[%s166 + $0xb0] sm:$0xff]
      %v197 = vld [vmem:[%s166 + $0xb8] sm:$0xff]
      %v198 = vld [vmem:[%s166 + $0xc0] sm:$0xff]
      %v199 = vld [vmem:[%s166 + $0xc8] sm:$0xff]
      %v200 = vld [vmem:[%s166 + $0xd0] sm:$0xff]
      %v201 = vld [vmem:[%s166 + $0xd8] sm:$0xff]
      %v202 = vld [vmem:[%s166 + $0xe0] sm:$0xff]
      %v203 = vld [vmem:[%s166 + $0xe8] sm:$0xff]
      %v204 = vld [vmem:[%s166 + $0xf0] sm:$0xff]
      %v205 = vld [vmem:[%s166 + $0xf8] sm:$0xff]
      %v206 = vld [vmem:[%s1] sm:$0xff]
      %v207 = vld [vmem:[%s1 + $0x8] sm:$0xff]
      %v208 = vld [vmem:[%s1 + $0x10] sm:$0xff]
      %v209 = vld [vmem:[%s1 + $0x18] sm:$0xff]
      %v210 = vld [vmem:[%s1 + $0x20] sm:$0xff]
      %v211 = vld [vmem:[%s1 + $0x28] sm:$0xff]
      %v212 = vld [vmem:[%s1 + $0x30] sm:$0xff]
      %v213 = vld [vmem:[%s1 + $0x38] sm:$0xff]
      %v214 = vld [vmem:[%s1 + $0x40] sm:$0xff]
      %v215 = vld [vmem:[%s1 + $0x48] sm:$0xff]
      %v216 = vld [vmem:[%s1 + $0x50] sm:$0xff]
      %v217 = vld [vmem:[%s1 + $0x58] sm:$0xff]
      %v218 = vld [vmem:[%s1 + $0x60] sm:$0xff]
      %v219 = vld [vmem:[%s1 + $0x68] sm:$0xff]
      %v220 = vld [vmem:[%s1 + $0x70] sm:$0xff]
      %v221 = vld [vmem:[%s1 + $0x78] sm:$0xff]
      %v222 = vld [vmem:[%s1 + $0x80] sm:$0xff]
      %v223 = vld [vmem:[%s1 + $0x88] sm:$0xff]
      %v224 = vld [vmem:[%s1 + $0x90] sm:$0xff]
      %v225 = vld [vmem:[%s1 + $0x98] sm:$0xff]
      %v226 = vld [vmem:[%s1 + $0xa0] sm:$0xff]
      %v227 = vld [vmem:[%s1 + $0xa8] sm:$0xff]
      %v228 = vld [vmem:[%s1 + $0xb0] sm:$0xff]
      %v229 = vld [vmem:[%s1 + $0xb8] sm:$0xff]
      %v230 = vld [vmem:[%s1 + $0xc0] sm:$0xff]
      %v231 = vld [vmem:[%s1 + $0xc8] sm:$0xff]
      %v232 = vld [vmem:[%s1 + $0xd0] sm:$0xff]
      %v233 = vld [vmem:[%s1 + $0xd8] sm:$0xff]
      %v234 = vld [vmem:[%s1 + $0xe0] sm:$0xff]
      %v235 = vld [vmem:[%s1 + $0xe8] sm:$0xff]
      %v236 = vld [vmem:[%s1 + $0xf0] sm:$0xff]
      %v237 = vld [vmem:[%s1 + $0xf8] sm:$0xff]
      %v238 = vld [vmem:[%s2] sm:$0x3]
      %v240 = vlaneseq
      %v241 = vshrl.u32 %v240, 7
      %v242 = vsub.s32 0, %v241
      %v243 = vrot.slane %v238, %v242
      %v244 = vlaneseq
      %v245 = vshrl.u32 %v244, 7
      %v246 = vsub.s32 1, %v245
      %v247 = vrot.slane %v238, %v246
      %250 = vmatprep.subr.mxu0 %v207
      %251 = vmatpush1.msra.mxu0 %v206
      %252 = vmatprep.subr.mxu0 %v209
      %253 = vmatpush1.msra.mxu0 %v208
      %254 = vmatprep.subr.mxu0 %v211
      %255 = vmatpush1.msra.mxu0 %v210
      %256 = vmatprep.subr.mxu0 %v213
      %257 = vmatpush1.msra.mxu0 %v212
      %258 = vmatprep.subr.mxu0 %v215
      %259 = vmatpush1.msra.mxu0 %v214
      %260 = vmatprep.subr.mxu0 %v217
      %261 = vmatpush1.msra.mxu0 %v216
      %262 = vmatprep.subr.mxu0 %v219
      %263 = vmatpush1.msra.mxu0 %v218
      %264 = vmatprep.subr.mxu0 %v221
      %265 = vmatpush1.msra.mxu0 %v220
      %266 = vmatprep.subr.mxu0 %v223
      %267 = vmatpush1.msra.mxu0 %v222
      %268 = vmatprep.subr.mxu0 %v225
      %269 = vmatpush1.msra.mxu0 %v224
      %270 = vmatprep.subr.mxu0 %v227
      %271 = vmatpush1.msra.mxu0 %v226
      %272 = vmatprep.subr.mxu0 %v229
      %273 = vmatpush1.msra.mxu0 %v228
      %274 = vmatprep.subr.mxu0 %v231
      %275 = vmatpush1.msra.mxu0 %v230
      %276 = vmatprep.subr.mxu0 %v233
      %277 = vmatpush1.msra.mxu0 %v232
      %278 = vmatprep.subr.mxu0 %v235
      %279 = vmatpush1.msra.mxu0 %v234
      %280 = vmatprep.subr.mxu0 %v237
      %281 = vmatpush1.msra.mxu0 %v236
      %282 = vmatprep.subr.mxu0 0.0
      %283 = vmatpush1.msra.mxu0 0.0
      %284 = vmatprep.subr.mxu0 0.0
      %285 = vmatpush1.msra.mxu0 0.0
      %286 = vmatprep.subr.mxu0 0.0
      %287 = vmatpush1.msra.mxu0 0.0
      %288 = vmatprep.subr.mxu0 0.0
      %289 = vmatpush1.msra.mxu0 0.0
      %290 = vmatprep.subr.mxu0 0.0
      %291 = vmatpush1.msra.mxu0 0.0
      %292 = vmatprep.subr.mxu0 0.0
      %293 = vmatpush1.msra.mxu0 0.0
      %294 = vmatprep.subr.mxu0 0.0
      %295 = vmatpush1.msra.mxu0 0.0
      %296 = vmatprep.subr.mxu0 0.0
      %297 = vmatpush1.msra.mxu0 0.0
      %298 = vmatprep.subr.mxu0 0.0
      %299 = vmatpush1.msra.mxu0 0.0
      %300 = vmatprep.subr.mxu0 0.0
      %301 = vmatpush1.msra.mxu0 0.0
      %302 = vmatprep.subr.mxu0 0.0
      %303 = vmatpush1.msra.mxu0 0.0
      %304 = vmatprep.subr.mxu0 0.0
      %305 = vmatpush1.msra.mxu0 0.0
      %306 = vmatprep.subr.mxu0 0.0
      %307 = vmatpush1.msra.mxu0 0.0
      %308 = vmatprep.subr.mxu0 0.0
      %309 = vmatpush1.msra.mxu0 0.0
      %310 = vmatprep.subr.mxu0 0.0
      %311 = vmatpush1.msra.mxu0 0.0
      %312 = vmatprep.subr.mxu0 0.0
      %313 = vmatpush1.msra.mxu0 0.0
      %314 = vmatprep.mubr.f32.mxu0 0.0
      %315 = vmatmul.mubr.f32.gmra.mrb[0].mxu0 %v174
      %v316 = vpop.f32.mrb[0].mxu0
      %v317 = vadd.f32 %v243, %v316
      %v318 = vpop.f32.mrb[0].mxu0
      %v319 = vadd.f32 %v247, %v318
      %320 = vmatprep.mubr.f32.mxu0 0.0
      %321 = vmatmul.mubr.f32.gmra.mrb[0].mxu0 %v175
      %v322 = vpop.f32.mrb[0].mxu0
      %v323 = vadd.f32 %v243, %v322
      %v324 = vpop.f32.mrb[0].mxu0
      %v325 = vadd.f32 %v247, %v324
      %326 = vmatprep.mubr.f32.mxu0 0.0
      %327 = vmatmul.mubr.f32.gmra.mrb[0].mxu0 %v176
      %v328 = vpop.f32.mrb[0].mxu0
      %v329 = vadd.f32 %v243, %v328
      %v330 = vpop.f32.mrb[0].mxu0
      %v331 = vadd.f32 %v247, %v330
      %332 = vmatprep.mubr.f32.mxu0 0.0
      %333 = vmatmul.mubr.f32.gmra.mrb[0].mxu0 %v177
      %v334 = vpop.f32.mrb[0].mxu0
      %v335 = vadd.f32 %v243, %v334
      %v336 = vpop.f32.mrb[0].mxu0
      %v337 = vadd.f32 %v247, %v336
      %338 = vmatprep.mubr.f32.mxu0 0.0
      %339 = vmatmul.mubr.f32.gmra.mrb[0].mxu0 %v178
      %v340 = vpop.f32.mrb[0].mxu0
      %v341 = vadd.f32 %v243, %v340
      %v342 = vpop.f32.mrb[0].mxu0
      %v343 = vadd.f32 %v247, %v342
      %344 = vmatprep.mubr.f32.mxu0 0.0
      %345 = vmatmul.mubr.f32.gmra.mrb[0].mxu0 %v179
      %v346 = vpop.f32.mrb[0].mxu0
      %v347 = vadd.f32 %v243, %v346
      %v348 = vpop.f32.mrb[0].mxu0
      %v349 = vadd.f32 %v247, %v348
      %350 = vmatprep.mubr.f32.mxu0 0.0
      %351 = vmatmul.mubr.f32.gmra.mrb[0].mxu0 %v180
      %v352 = vpop.f32.mrb[0].mxu0
      %v353 = vadd.f32 %v243, %v352
      %v354 = vpop.f32.mrb[0].mxu0
      %v355 = vadd.f32 %v247, %v354
      %356 = vmatprep.mubr.f32.mxu0 0.0
      %357 = vmatmul.mubr.f32.gmra.mrb[0].mxu0 %v181
      %v358 = vpop.f32.mrb[0].mxu0
      %v359 = vadd.f32 %v243, %v358
      %v360 = vpop.f32.mrb[0].mxu0
      %v361 = vadd.f32 %v247, %v360
      %362 = vmatprep.mubr.f32.mxu0 0.0
      %363 = vmatmul.mubr.f32.gmra.mrb[0].mxu0 %v182
      %v364 = vpop.f32.mrb[0].mxu0
      %v365 = vadd.f32 %v243, %v364
      %v366 = vpop.f32.mrb[0].mxu0
      %v367 = vadd.f32 %v247, %v366
      %368 = vmatprep.mubr.f32.mxu0 0.0
      %369 = vmatmul.mubr.f32.gmra.mrb[0].mxu0 %v183
      %v370 = vpop.f32.mrb[0].mxu0
      %v371 = vadd.f32 %v243, %v370
      %v372 = vpop.f32.mrb[0].mxu0
      %v373 = vadd.f32 %v247, %v372
      %374 = vmatprep.mubr.f32.mxu0 0.0
      %375 = vmatmul.mubr.f32.gmra.mrb[0].mxu0 %v184
      %v376 = vpop.f32.mrb[0].mxu0
      %v377 = vadd.f32 %v243, %v376
      %v378 = vpop.f32.mrb[0].mxu0
      %v379 = vadd.f32 %v247, %v378
      %380 = vmatprep.mubr.f32.mxu0 0.0
      %381 = vmatmul.mubr.f32.gmra.mrb[0].mxu0 %v185
      %v382 = vpop.f32.mrb[0].mxu0
      %v383 = vadd.f32 %v243, %v382
      %v384 = vpop.f32.mrb[0].mxu0
      %v385 = vadd.f32 %v247, %v384
      %386 = vmatprep.mubr.f32.mxu0 0.0
      %387 = vmatmul.mubr.f32.gmra.mrb[0].mxu0 %v186
      %v388 = vpop.f32.mrb[0].mxu0
      %v389 = vadd.f32 %v243, %v388
      %v390 = vpop.f32.mrb[0].mxu0
      %v391 = vadd.f32 %v247, %v390
      %392 = vmatprep.mubr.f32.mxu0 0.0
      %393 = vmatmul.mubr.f32.gmra.mrb[0].mxu0 %v187
      %v394 = vpop.f32.mrb[0].mxu0
      %v395 = vadd.f32 %v243, %v394
      %v396 = vpop.f32.mrb[0].mxu0
      %v397 = vadd.f32 %v247, %v396
      %398 = vmatprep.mubr.f32.mxu0 0.0
      %399 = vmatmul.mubr.f32.gmra.mrb[0].mxu0 %v188
      %v400 = vpop.f32.mrb[0].mxu0
      %v401 = vadd.f32 %v243, %v400
      %v402 = vpop.f32.mrb[0].mxu0
      %v403 = vadd.f32 %v247, %v402
      %404 = vmatprep.mubr.f32.mxu0 0.0
      %405 = vmatmul.mubr.f32.gmra.mrb[0].mxu0 %v189
      %v406 = vpop.f32.mrb[0].mxu0
      %v407 = vadd.f32 %v243, %v406
      %v408 = vpop.f32.mrb[0].mxu0
      %v409 = vadd.f32 %v247, %v408
      %410 = vmatprep.mubr.f32.mxu0 0.0
      %411 = vmatmul.mubr.f32.gmra.mrb[0].mxu0 %v190
      %v412 = vpop.f32.mrb[0].mxu0
      %v413 = vadd.f32 %v243, %v412
      %v414 = vpop.f32.mrb[0].mxu0
      %v415 = vadd.f32 %v247, %v414
      %416 = vmatprep.mubr.f32.mxu0 0.0
      %417 = vmatmul.mubr.f32.gmra.mrb[0].mxu0 %v191
      %v418 = vpop.f32.mrb[0].mxu0
      %v419 = vadd.f32 %v243, %v418
      %v420 = vpop.f32.mrb[0].mxu0
      %v421 = vadd.f32 %v247, %v420
      %422 = vmatprep.mubr.f32.mxu0 0.0
      %423 = vmatmul.mubr.f32.gmra.mrb[0].mxu0 %v192
      %v424 = vpop.f32.mrb[0].mxu0
      %v425 = vadd.f32 %v243, %v424
      %v426 = vpop.f32.mrb[0].mxu0
      %v427 = vadd.f32 %v247, %v426
      %428 = vmatprep.mubr.f32.mxu0 0.0
      %429 = vmatmul.mubr.f32.gmra.mrb[0].mxu0 %v193
      %v430 = vpop.f32.mrb[0].mxu0
      %v431 = vadd.f32 %v243, %v430
      %v432 = vpop.f32.mrb[0].mxu0
      %v433 = vadd.f32 %v247, %v432
      %434 = vmatprep.mubr.f32.mxu0 0.0
      %435 = vmatmul.mubr.f32.gmra.mrb[0].mxu0 %v194
      %v436 = vpop.f32.mrb[0].mxu0
      %v437 = vadd.f32 %v243, %v436
      %v438 = vpop.f32.mrb[0].mxu0
      %v439 = vadd.f32 %v247, %v438
      %440 = vmatprep.mubr.f32.mxu0 0.0
      %441 = vmatmul.mubr.f32.gmra.mrb[0].mxu0 %v195
      %v442 = vpop.f32.mrb[0].mxu0
      %v443 = vadd.f32 %v243, %v442
      %v444 = vpop.f32.mrb[0].mxu0
      %v445 = vadd.f32 %v247, %v444
      %446 = vmatprep.mubr.f32.mxu0 0.0
      %447 = vmatmul.mubr.f32.gmra.mrb[0].mxu0 %v196
      %v448 = vpop.f32.mrb[0].mxu0
      %v449 = vadd.f32 %v243, %v448
      %v450 = vpop.f32.mrb[0].mxu0
      %v451 = vadd.f32 %v247, %v450
      %452 = vmatprep.mubr.f32.mxu0 0.0
      %453 = vmatmul.mubr.f32.gmra.mrb[0].mxu0 %v197
      %v454 = vpop.f32.mrb[0].mxu0
      %v455 = vadd.f32 %v243, %v454
      %v456 = vpop.f32.mrb[0].mxu0
      %v457 = vadd.f32 %v247, %v456
      %458 = vmatprep.mubr.f32.mxu0 0.0
      %459 = vmatmul.mubr.f32.gmra.mrb[0].mxu0 %v198
      %v460 = vpop.f32.mrb[0].mxu0
      %v461 = vadd.f32 %v243, %v460
      %v462 = vpop.f32.mrb[0].mxu0
      %v463 = vadd.f32 %v247, %v462
      %464 = vmatprep.mubr.f32.mxu0 0.0
      %465 = vmatmul.mubr.f32.gmra.mrb[0].mxu0 %v199
      %v466 = vpop.f32.mrb[0].mxu0
      %v467 = vadd.f32 %v243, %v466
      %v468 = vpop.f32.mrb[0].mxu0
      %v469 = vadd.f32 %v247, %v468
      %470 = vmatprep.mubr.f32.mxu0 0.0
      %471 = vmatmul.mubr.f32.gmra.mrb[0].mxu0 %v200
      %v472 = vpop.f32.mrb[0].mxu0
      %v473 = vadd.f32 %v243, %v472
      %v474 = vpop.f32.mrb[0].mxu0
      %v475 = vadd.f32 %v247, %v474
      %476 = vmatprep.mubr.f32.mxu0 0.0
      %477 = vmatmul.mubr.f32.gmra.mrb[0].mxu0 %v201
      %v478 = vpop.f32.mrb[0].mxu0
      %v479 = vadd.f32 %v243, %v478
      %v480 = vpop.f32.mrb[0].mxu0
      %v481 = vadd.f32 %v247, %v480
      %482 = vmatprep.mubr.f32.mxu0 0.0
      %483 = vmatmul.mubr.f32.gmra.mrb[0].mxu0 %v202
      %v484 = vpop.f32.mrb[0].mxu0
      %v485 = vadd.f32 %v243, %v484
      %v486 = vpop.f32.mrb[0].mxu0
      %v487 = vadd.f32 %v247, %v486
      %488 = vmatprep.mubr.f32.mxu0 0.0
      %489 = vmatmul.mubr.f32.gmra.mrb[0].mxu0 %v203
      %v490 = vpop.f32.mrb[0].mxu0
      %v491 = vadd.f32 %v243, %v490
      %v492 = vpop.f32.mrb[0].mxu0
      %v493 = vadd.f32 %v247, %v492
      %494 = vmatprep.mubr.f32.mxu0 0.0
      %495 = vmatmul.mubr.f32.gmra.mrb[0].mxu0 %v204
      %v496 = vpop.f32.mrb[0].mxu0
      %v497 = vadd.f32 %v243, %v496
      %v498 = vpop.f32.mrb[0].mxu0
      %v499 = vadd.f32 %v247, %v498
      %500 = vmatprep.mubr.f32.mxu0 0.0
      %501 = vmatmul.mubr.f32.gmra.mrb[0].mxu0 %v205
      %v502 = vpop.f32.mrb[0].mxu0
      %v503 = vadd.f32 %v243, %v502
      %v504 = vpop.f32.mrb[0].mxu0
      %v505 = vadd.f32 %v247, %v504
      %506 = vdwg.mxu0
      %v507 = vadd.f32 %v319, 1e-09
      %v508 = vadd.f32 %v325, 1e-09
      %v509 = vadd.f32 %v331, 1e-09
      %v510 = vadd.f32 %v337, 1e-09
      %v511 = vadd.f32 %v343, 1e-09
      %v512 = vadd.f32 %v349, 1e-09
      %v513 = vadd.f32 %v355, 1e-09
      %v514 = vadd.f32 %v361, 1e-09
      %v515 = vadd.f32 %v367, 1e-09
      %v516 = vadd.f32 %v373, 1e-09
      %v517 = vadd.f32 %v379, 1e-09
      %v518 = vadd.f32 %v385, 1e-09
      %v519 = vadd.f32 %v391, 1e-09
      %v520 = vadd.f32 %v397, 1e-09
      %v521 = vadd.f32 %v403, 1e-09
      %v522 = vadd.f32 %v409, 1e-09
      %v523 = vadd.f32 %v415, 1e-09
      %v524 = vadd.f32 %v421, 1e-09
      %v525 = vadd.f32 %v427, 1e-09
      %v526 = vadd.f32 %v433, 1e-09
      %v527 = vadd.f32 %v439, 1e-09
      %v528 = vadd.f32 %v445, 1e-09
      %v529 = vadd.f32 %v451, 1e-09
      %v530 = vadd.f32 %v457, 1e-09
      %v531 = vadd.f32 %v463, 1e-09
      %v532 = vadd.f32 %v469, 1e-09
      %v533 = vadd.f32 %v475, 1e-09
      %v534 = vadd.f32 %v481, 1e-09
      %v535 = vadd.f32 %v487, 1e-09
      %v536 = vadd.f32 %v493, 1e-09
      %v537 = vadd.f32 %v499, 1e-09
      %v538 = vadd.f32 %v505, 1e-09
      %v539 = vrcp.pop %v507
      %v540 = vrcp.pop %v508
      %v541 = vrcp.pop %v509
      %v542 = vrcp.pop %v510
      %v543 = vrcp.pop %v511
      %v544 = vrcp.pop %v512
      %v545 = vrcp.pop %v513
      %v546 = vrcp.pop %v514
      %v547 = vrcp.pop %v515
      %v548 = vrcp.pop %v516
      %v549 = vrcp.pop %v517
      %v550 = vrcp.pop %v518
      %v551 = vrcp.pop %v519
      %v552 = vrcp.pop %v520
      %v553 = vrcp.pop %v521
      %v554 = vrcp.pop %v522
      %v555 = vrcp.pop %v523
      %v556 = vrcp.pop %v524
      %v557 = vrcp.pop %v525
      %v558 = vrcp.pop %v526
      %v559 = vrcp.pop %v527
      %v560 = vrcp.pop %v528
      %v561 = vrcp.pop %v529
      %v562 = vrcp.pop %v530
      %v563 = vrcp.pop %v531
      %v564 = vrcp.pop %v532
      %v565 = vrcp.pop %v533
      %v566 = vrcp.pop %v534
      %v567 = vrcp.pop %v535
      %v568 = vrcp.pop %v536
      %v569 = vrcp.pop %v537
      %v570 = vrcp.pop %v538
      %v571 = vmul.f32 %v317, %v539
      %v572 = vmul.f32 %v323, %v540
      %v573 = vmul.f32 %v329, %v541
      %v574 = vmul.f32 %v335, %v542
      %v575 = vmul.f32 %v341, %v543
      %v576 = vmul.f32 %v347, %v544
      %v577 = vmul.f32 %v353, %v545
      %v578 = vmul.f32 %v359, %v546
      %v579 = vmul.f32 %v365, %v547
      %v580 = vmul.f32 %v371, %v548
      %v581 = vmul.f32 %v377, %v549
      %v582 = vmul.f32 %v383, %v550
      %v583 = vmul.f32 %v389, %v551
      %v584 = vmul.f32 %v395, %v552
      %v585 = vmul.f32 %v401, %v553
      %v586 = vmul.f32 %v407, %v554
      %v587 = vmul.f32 %v413, %v555
      %v588 = vmul.f32 %v419, %v556
      %v589 = vmul.f32 %v425, %v557
      %v590 = vmul.f32 %v431, %v558
      %v591 = vmul.f32 %v437, %v559
      %v592 = vmul.f32 %v443, %v560
      %v593 = vmul.f32 %v449, %v561
      %v594 = vmul.f32 %v455, %v562
      %v595 = vmul.f32 %v461, %v563
      %v596 = vmul.f32 %v467, %v564
      %v597 = vmul.f32 %v473, %v565
      %v598 = vmul.f32 %v479, %v566
      %v599 = vmul.f32 %v485, %v567
      %v600 = vmul.f32 %v491, %v568
      %v601 = vmul.f32 %v497, %v569
      %v602 = vmul.f32 %v503, %v570
      %v603 = vmul.f32 %v507, %v571
      %v604 = vmul.f32 %v508, %v572
      %v605 = vmul.f32 %v509, %v573
      %v606 = vmul.f32 %v510, %v574
      %v607 = vmul.f32 %v511, %v575
      %v608 = vmul.f32 %v512, %v576
      %v609 = vmul.f32 %v513, %v577
      %v610 = vmul.f32 %v514, %v578
      %v611 = vmul.f32 %v515, %v579
      %v612 = vmul.f32 %v516, %v580
      %v613 = vmul.f32 %v517, %v581
      %v614 = vmul.f32 %v518, %v582
      %v615 = vmul.f32 %v519, %v583
      %v616 = vmul.f32 %v520, %v584
      %v617 = vmul.f32 %v521, %v585
      %v618 = vmul.f32 %v522, %v586
      %v619 = vmul.f32 %v523, %v587
      %v620 = vmul.f32 %v524, %v588
      %v621 = vmul.f32 %v525, %v589
      %v622 = vmul.f32 %v526, %v590
      %v623 = vmul.f32 %v527, %v591
      %v624 = vmul.f32 %v528, %v592
      %v625 = vmul.f32 %v529, %v593
      %v626 = vmul.f32 %v530, %v594
      %v627 = vmul.f32 %v531, %v595
      %v628 = vmul.f32 %v532, %v596
      %v629 = vmul.f32 %v533, %v597
      %v630 = vmul.f32 %v534, %v598
      %v631 = vmul.f32 %v535, %v599
      %v632 = vmul.f32 %v536, %v600
      %v633 = vmul.f32 %v537, %v601
      %v634 = vmul.f32 %v538, %v602
      %635 = vst [vmem:[%s172] sm:$0xff] %v603
      %636 = vst [vmem:[%s172 + $0x8] sm:$0xff] %v604
      %637 = vst [vmem:[%s172 + $0x10] sm:$0xff] %v605
      %638 = vst [vmem:[%s172 + $0x18] sm:$0xff] %v606
      %639 = vst [vmem:[%s172 + $0x20] sm:$0xff] %v607
      %640 = vst [vmem:[%s172 + $0x28] sm:$0xff] %v608
      %641 = vst [vmem:[%s172 + $0x30] sm:$0xff] %v609
      %642 = vst [vmem:[%s172 + $0x38] sm:$0xff] %v610
      %643 = vst [vmem:[%s172 + $0x40] sm:$0xff] %v611
      %644 = vst [vmem:[%s172 + $0x48] sm:$0xff] %v612
      %645 = vst [vmem:[%s172 + $0x50] sm:$0xff] %v613
      %646 = vst [vmem:[%s172 + $0x58] sm:$0xff] %v614
      %647 = vst [vmem:[%s172 + $0x60] sm:$0xff] %v615
      %648 = vst [vmem:[%s172 + $0x68] sm:$0xff] %v616
      %649 = vst [vmem:[%s172 + $0x70] sm:$0xff] %v617
      %650 = vst [vmem:[%s172 + $0x78] sm:$0xff] %v618
      %651 = vst [vmem:[%s172 + $0x80] sm:$0xff] %v619
      %652 = vst [vmem:[%s172 + $0x88] sm:$0xff] %v620
      %653 = vst [vmem:[%s172 + $0x90] sm:$0xff] %v621
      %654 = vst [vmem:[%s172 + $0x98] sm:$0xff] %v622
      %655 = vst [vmem:[%s172 + $0xa0] sm:$0xff] %v623
      %656 = vst [vmem:[%s172 + $0xa8] sm:$0xff] %v624
      %657 = vst [vmem:[%s172 + $0xb0] sm:$0xff] %v625
      %658 = vst [vmem:[%s172 + $0xb8] sm:$0xff] %v626
      %659 = vst [vmem:[%s172 + $0xc0] sm:$0xff] %v627
      %660 = vst [vmem:[%s172 + $0xc8] sm:$0xff] %v628
      %661 = vst [vmem:[%s172 + $0xd0] sm:$0xff] %v629
      %662 = vst [vmem:[%s172 + $0xd8] sm:$0xff] %v630
      %663 = vst [vmem:[%s172 + $0xe0] sm:$0xff] %v631
      %664 = vst [vmem:[%s172 + $0xe8] sm:$0xff] %v632
      %665 = vst [vmem:[%s172 + $0xf0] sm:$0xff] %v633
      %666 = vst [vmem:[%s172 + $0xf8] sm:$0xff] %v634
      %s667 = smul.u32 32, %s14
      %p668 = scmp.lt.s32.totalorder %s667, 63
      %s669 = scalar_select %p668, %s667, 63
      %s670 = smul.addr %s669, 8
      %s671 = scalar_lea.vmem %s3, %s670
      // Predicated region
      $region33: #{convi_forward.1} parent=31 // pred_check
        %p672 = pneg %p100
      $region34: #{convi_forward.1} parent=31 // pred_check_branch
        %674 = sbr.rel (%p672) target = $region36
      $region35: #{convi_forward.1} parent=31 // pred_region
        %s675 = smul.u32 32, %s14
      $region36: #{convi_forward.1} parent=31 // pred_fallthru
        _
    $region32: #{convi_forward.1} parent=5 // pred_fallthru
      _
    %p676 = scmp.le.s32.totalorder 2, %s9
    // Predicated region
    $region37: #{convi_forward.1} parent=5 // pred_check
      %p677 = pneg %p676
    $region38: #{convi_forward.1} parent=5 // pred_check_branch
      %679 = sbr.rel (%p677) target = $region40
    $region39: #{convi_forward.1} parent=5 // pred_region
      %s680 = ssub.s32 %s9, 2
      // Predicated region
      $region41: #{convi_forward.1} parent=39 // pred_check
        %p681 = pneg %p106
      $region42: #{convi_forward.1} parent=39 // pred_check_branch
        %683 = sbr.rel (%p681) target = $region44
      $region43: #{convi_forward.1} parent=39 // pred_region
        %s684 = smul.u32 32, %s15
        %p685 = scmp.lt.s32.totalorder %s684, 63
        %s686 = scalar_select %p685, %s684, 63
        %s687 = smul.addr %s686, 8
        %s688 = scalar_lea.vmem %s3, %s687
      $region44: #{convi_forward.1} parent=39 // pred_fallthru
        _
    $region40: #{convi_forward.1} parent=5 // pred_fallthru
      _
  $region6: #{convi_forward.1} parent=0 // loop_footer
    %s13 = sadd.s32 1, %s9
  $region7: #{convi_forward.1} parent=0 // loop_footer_branch
    %8 = sbr.rel target = $region3
  $region8: #{convi_forward.1} parent=0 // loop_exit
    _

</llo_original>
